<compile_context>
chip_gen: v6e
topology: v6e:2x2x1
jax: 0.10.0
libtpu: 0.0.40
codegen_flags: <defaults>
</compile_context>

<pallas_src>
import jax
import jax.numpy as jnp
from jax.experimental import pallas as pl
from jax.experimental.pallas import tpu as pltpu


def _round_up(x, m):
    return (x + m - 1) // m * m


def _lora_linear_kernel(x_ref, w_ref, b_ref, wa_ref, wb_ref, o_ref,
                        acc_ref, xa_ref):
    j = pl.program_id(1)
    k = pl.program_id(2)
    nk = pl.num_programs(2)

    @pl.when(k == 0)
    def _():
        acc_ref[...] = jnp.zeros_like(acc_ref)

    # LoRA stage 1: xa = x @ W_a. Independent of the N tile -> compute it only
    # on the first N tile and keep it resident in VMEM scratch for the rest.
    @pl.when(j == 0)
    def _():
        @pl.when(k == 0)
        def _():
            xa_ref[...] = jnp.zeros_like(xa_ref)

        xa_ref[...] += jnp.dot(x_ref[...], wa_ref[...],
                               preferred_element_type=jnp.float32)

    # Base linear path on the MXU with f32 accumulation.
    acc_ref[...] += jnp.dot(x_ref[...], w_ref[...],
                            preferred_element_type=jnp.float32)

    # Finalize: one tiny rank-contraction + bias add per output tile.
    @pl.when(k == nk - 1)
    def _():
        lora = jnp.dot(xa_ref[...], wb_ref[...],
                       preferred_element_type=jnp.float32)
        o_ref[...] = (acc_ref[...] + lora + b_ref[...]).astype(o_ref.dtype)


def linear_with_lora(x, w_lin, b_lin, w_a, w_b, alpha, *,
                     compute_dtype=None, tm=None, tn=None, tk=None):
    """x: [B, in], w_lin: [in, out] (nn.Linear weight pre-transposed),
    b_lin: [out], w_a: [in, rank], w_b: [rank, out]."""
    B, K = x.shape
    Kw, N = w_lin.shape
    assert Kw == K
    rank = w_a.shape[1]
    out_dtype = x.dtype
    compute_dtype = compute_dtype or x.dtype

    # Lane/sublane-friendly padded shapes.
    Mp = _round_up(B, 8)
    Kp = _round_up(K, 128)
    Np = _round_up(N, 128)
    Rp = _round_up(rank, 8)

    # Tile sizes: largest that double-buffer comfortably in VMEM on v5e-v7x
    # (footprint ~2 MiB at the defaults), overridable per call.
    tm = tm or min(128, Mp)
    tn = tn or min(256, Np)
    tk = tk or min(512, Kp)
    Mp = _round_up(Mp, tm)
    Np = _round_up(Np, tn)
    Kp = _round_up(Kp, tk)

    # Zero-padded, pre-laid-out operands. alpha folded into W_b; W_b and the
    # bias stay f32 so the f32 xa accumulator is never downcast.
    x_p = jnp.zeros((Mp, Kp), compute_dtype).at[:B, :K].set(
        x.astype(compute_dtype))
    w_p = jnp.zeros((Kp, Np), compute_dtype).at[:K, :N].set(
        w_lin.astype(compute_dtype))
    b_p = jnp.zeros((1, Np), jnp.float32).at[0, :N].set(
        b_lin.astype(jnp.float32))
    wa_p = jnp.zeros((Kp, Rp), compute_dtype).at[:K, :rank].set(
        w_a.astype(compute_dtype))
    wb_p = jnp.zeros((Rp, Np), jnp.float32).at[:rank, :N].set(
        (float(alpha) * w_b).astype(jnp.float32))

    grid = (Mp // tm, Np // tn, Kp // tk)

    csize = jnp.dtype(compute_dtype).itemsize
    osize = jnp.dtype(out_dtype).itemsize
    cost = pl.CostEstimate(
        flops=2 * Mp * Kp * Np + 2 * Mp * Kp * Rp + 2 * Mp * Rp * Np,
        transcendentals=0,
        bytes_accessed=(Mp * Kp * csize + Kp * Np * csize + Np * 4
                        + Kp * Rp * csize + Rp * Np * 4 + Mp * Np * osize),
    )

    out_p = pl.pallas_call(
        _lora_linear_kernel,
        out_shape=jax.ShapeDtypeStruct((Mp, Np), out_dtype),
        grid_spec=pltpu.PrefetchScalarGridSpec(
            num_scalar_prefetch=0,
            grid=grid,
            in_specs=[
                pl.BlockSpec((tm, tk), lambda i, j, k: (i, k)),   # x
                pl.BlockSpec((tk, tn), lambda i, j, k: (k, j)),   # W_lin
                pl.BlockSpec((1, tn), lambda i, j, k: (0, j)),    # bias
                pl.BlockSpec((tk, Rp), lambda i, j, k: (k, 0)),   # W_a
                pl.BlockSpec((Rp, tn), lambda i, j, k: (0, j)),   # alpha * W_b
            ],
            out_specs=pl.BlockSpec((tm, tn), lambda i, j, k: (i, j)),
            scratch_shapes=[
                pltpu.VMEM((tm, tn), jnp.float32),   # main f32 accumulator
                pltpu.VMEM((tm, Rp), jnp.float32),   # xa = x @ W_a (resident)
            ],
        ),
        compiler_params=pltpu.CompilerParams(
            # M parallel (megacore / v7x 2-TC); N carries xa scratch so it must
            # stay arbitrary; K is the reduction.
            dimension_semantics=("parallel", "arbitrary", "arbitrary"),
        ),
        cost_estimate=cost,
    )(x_p, w_p, b_p, wa_p, wb_p)

    return out_p[:B, :N]


if __name__ == "__main__":
    key = jax.random.PRNGKey(0)

    def run_case(k, B, in_dim, out_dim, rank, alpha, **tiles):
        kx, kw, kb, ka, kbb = jax.random.split(k, 5)
        x = jax.random.normal(kx, (B, in_dim), jnp.float32)
        # nn.Linear stores weight as [out, in]; pre-transpose to [in, out].
        w_torch = jax.random.normal(kw, (out_dim, in_dim), jnp.float32) * 0.1
        w_lin = w_torch.T
        b_lin = jax.random.normal(kb, (out_dim,), jnp.float32) * 0.1
        # LoRA init: W_a = randn(in, rank)/sqrt(rank); W_b is zeros in
        # __init__ -- use a nonzero W_b so the LoRA path is exercised.
        w_a = jax.random.normal(ka, (in_dim, rank), jnp.float32) / jnp.sqrt(
            jnp.float32(rank))
        w_b = jax.random.normal(kbb, (rank, out_dim), jnp.float32) * 0.05

        out = linear_with_lora(x, w_lin, b_lin, w_a, w_b, alpha, **tiles)
        out = jax.block_until_ready(out)

        ref = x @ w_lin + b_lin + alpha * ((x @ w_a) @ w_b)
        assert out.shape == ref.shape
        err = float(jnp.max(jnp.abs(out - ref)))
        assert jnp.allclose(out, ref, atol=2e-3, rtol=2e-3), err
        return out

    k1, k2 = jax.random.split(key)

    # Small shapes implied by the module's forward (Linear on 2D input).
    run_case(k1, B=8, in_dim=32, out_dim=64, rank=4, alpha=8.0)

    # Multi-tile grid (2,2,2): exercises the f32 accumulator init/finalize and
    # the xa-reuse-across-N-tiles path.
    run_case(k2, B=32, in_dim=256, out_dim=256, rank=4, alpha=8.0,
             tm=16, tn=128, tk=128)

    print("KERNEL_OK")
</pallas_src>

<mosaic_0001>
module attributes {stable_mosaic.version = 11 : i64} {
  func.func @_lora_linear_kernel(%arg0: i32, %arg1: i32, %arg2: i32, %arg3: memref<8x128xf32, #tpu.memory_space<vmem>>, %arg4: memref<128x128xf32, #tpu.memory_space<vmem>>, %arg5: memref<1x128xf32, #tpu.memory_space<vmem>>, %arg6: memref<128x8xf32, #tpu.memory_space<vmem>>, %arg7: memref<8x128xf32, #tpu.memory_space<vmem>>, %arg8: memref<8x128xf32, #tpu.memory_space<vmem>>, %arg9: memref<8x128xf32, #tpu.memory_space<vmem>>, %arg10: memref<8x8xf32, #tpu.memory_space<vmem>>) attributes {dimension_semantics = [#tpu.dimension_semantics<parallel>, #tpu.dimension_semantics<arbitrary>, #tpu.dimension_semantics<arbitrary>], iteration_bounds = array<i64: 1, 1, 1>, scalar_prefetch = 0 : i64, scratch_operands = 2 : i64, tpu.core_type = #tpu.core_type<tc>, window_params = [{transform_indices = @transform_0, window_bounds = array<i64: 8, 128>}, {transform_indices = @transform_1, window_bounds = array<i64: 128, 128>}, {transform_indices = @transform_2, window_bounds = array<i64: 1, 128>}, {transform_indices = @transform_3, window_bounds = array<i64: 128, 8>}, {transform_indices = @transform_4, window_bounds = array<i64: 8, 128>}, {transform_indices = @transform_5, window_bounds = array<i64: 8, 128>}]} {
    %c0_i32 = arith.constant 0 : i32
    %0 = arith.cmpi eq, %arg2, %c0_i32 : i32
    %1 = arith.extui %0 : i1 to i32
    %c0_i32_0 = arith.constant 0 : i32
    %2 = arith.cmpi ne, %1, %c0_i32_0 : i32
    scf.if %2 {
      %cst_12 = arith.constant 0.000000e+00 : f32
      %15 = vector.broadcast %cst_12 : f32 to vector<8x128xf32>
      %c0_13 = arith.constant 0 : index
      %c0_14 = arith.constant 0 : index
      %16 = vector.load %arg9[%c0_13, %c0_14] : memref<8x128xf32, #tpu.memory_space<vmem>>, vector<8x128xf32>
      tpu.vector_store %arg9[%c0_13, %c0_14], %15 {strides = array<i32>} : memref<8x128xf32, #tpu.memory_space<vmem>>, vector<8x128xf32>,
    } else {
    }
    %c0_i32_1 = arith.constant 0 : i32
    %3 = arith.cmpi eq, %arg1, %c0_i32_1 : i32
    %4 = arith.extui %3 : i1 to i32
    %c0_i32_2 = arith.constant 0 : i32
    %5 = arith.cmpi ne, %4, %c0_i32_2 : i32
    scf.if %5 {
      %c0_i32_12 = arith.constant 0 : i32
      %15 = arith.cmpi eq, %arg2, %c0_i32_12 : i32
      %16 = arith.extui %15 : i1 to i32
      %c0_i32_13 = arith.constant 0 : i32
      %17 = arith.cmpi ne, %16, %c0_i32_13 : i32
      scf.if %17 {
        %cst_23 = arith.constant 0.000000e+00 : f32
        %24 = vector.broadcast %cst_23 : f32 to vector<8x8xf32>
        %c0_24 = arith.constant 0 : index
        %c0_25 = arith.constant 0 : index
        %25 = vector.load %arg10[%c0_24, %c0_25] : memref<8x8xf32, #tpu.memory_space<vmem>>, vector<8x8xf32>
        tpu.vector_store %arg10[%c0_24, %c0_25], %24 {strides = array<i32>} : memref<8x8xf32, #tpu.memory_space<vmem>>, vector<8x8xf32>,
      } else {
      }
      %c0_14 = arith.constant 0 : index
      %c0_15 = arith.constant 0 : index
      %18 = vector.load %arg10[%c0_14, %c0_15] : memref<8x8xf32, #tpu.memory_space<vmem>>, vector<8x8xf32>
      %c0_16 = arith.constant 0 : index
      %c0_17 = arith.constant 0 : index
      %19 = vector.load %arg3[%c0_16, %c0_17] : memref<8x128xf32, #tpu.memory_space<vmem>>, vector<8x128xf32>
      %c0_18 = arith.constant 0 : index
      %c0_19 = arith.constant 0 : index
      %20 = vector.load %arg6[%c0_18, %c0_19] : memref<128x8xf32, #tpu.memory_space<vmem>>, vector<128x8xf32>
      %cst_20 = arith.constant dense<0.000000e+00> : vector<8x8xf32>
      %21 = tpu.matmul %19, %20, %cst_20 {dimension_numbers = #tpu.dot_dimension_numbers<[1], [0], [0], [1], [0, 0, 1, 1], [], []>} : vector<8x128xf32>, vector<128x8xf32>, vector<8x8xf32> -> vector<8x8xf32>
      %22 = arith.addf %18, %21 : vector<8x8xf32>
      %c0_21 = arith.constant 0 : index
      %c0_22 = arith.constant 0 : index
      %23 = vector.load %arg10[%c0_21, %c0_22] : memref<8x8xf32, #tpu.memory_space<vmem>>, vector<8x8xf32>
      tpu.vector_store %arg10[%c0_21, %c0_22], %22 {strides = array<i32>} : memref<8x8xf32, #tpu.memory_space<vmem>>, vector<8x8xf32>,
    } else {
    }
    %c0 = arith.constant 0 : index
    %c0_3 = arith.constant 0 : index
    %6 = vector.load %arg9[%c0, %c0_3] : memref<8x128xf32, #tpu.memory_space<vmem>>, vector<8x128xf32>
    %c0_4 = arith.constant 0 : index
    %c0_5 = arith.constant 0 : index
    %7 = vector.load %arg3[%c0_4, %c0_5] : memref<8x128xf32, #tpu.memory_space<vmem>>, vector<8x128xf32>
    %c0_6 = arith.constant 0 : index
    %c0_7 = arith.constant 0 : index
    %8 = vector.load %arg4[%c0_6, %c0_7] : memref<128x128xf32, #tpu.memory_space<vmem>>, vector<128x128xf32>
    %cst = arith.constant dense<0.000000e+00> : vector<8x128xf32>
    %9 = tpu.matmul %7, %8, %cst {dimension_numbers = #tpu.dot_dimension_numbers<[1], [0], [0], [1], [0, 0, 1, 1], [], []>} : vector<8x128xf32>, vector<128x128xf32>, vector<8x128xf32> -> vector<8x128xf32>
    %10 = arith.addf %6, %9 : vector<8x128xf32>
    %c0_8 = arith.constant 0 : index
    %c0_9 = arith.constant 0 : index
    %11 = vector.load %arg9[%c0_8, %c0_9] : memref<8x128xf32, #tpu.memory_space<vmem>>, vector<8x128xf32>
    tpu.vector_store %arg9[%c0_8, %c0_9], %10 {strides = array<i32>} : memref<8x128xf32, #tpu.memory_space<vmem>>, vector<8x128xf32>,
    %c0_i32_10 = arith.constant 0 : i32
    %12 = arith.cmpi eq, %arg2, %c0_i32_10 : i32
    %13 = arith.extui %12 : i1 to i32
    %c0_i32_11 = arith.constant 0 : i32
    %14 = arith.cmpi ne, %13, %c0_i32_11 : i32
    scf.if %14 {
      %c0_12 = arith.constant 0 : index
      %c0_13 = arith.constant 0 : index
      %15 = vector.load %arg10[%c0_12, %c0_13] : memref<8x8xf32, #tpu.memory_space<vmem>>, vector<8x8xf32>
      %c0_14 = arith.constant 0 : index
      %c0_15 = arith.constant 0 : index
      %16 = vector.load %arg7[%c0_14, %c0_15] : memref<8x128xf32, #tpu.memory_space<vmem>>, vector<8x128xf32>
      %cst_16 = arith.constant dense<0.000000e+00> : vector<8x128xf32>
      %17 = tpu.matmul %15, %16, %cst_16 {dimension_numbers = #tpu.dot_dimension_numbers<[1], [0], [0], [1], [0, 0, 1, 1], [], []>} : vector<8x8xf32>, vector<8x128xf32>, vector<8x128xf32> -> vector<8x128xf32>
      %c0_17 = arith.constant 0 : index
      %c0_18 = arith.constant 0 : index
      %18 = vector.load %arg9[%c0_17, %c0_18] : memref<8x128xf32, #tpu.memory_space<vmem>>, vector<8x128xf32>
      %19 = arith.addf %18, %17 : vector<8x128xf32>
      %c0_19 = arith.constant 0 : index
      %c0_20 = arith.constant 0 : index
      %20 = vector.load %arg5[%c0_19, %c0_20] : memref<1x128xf32, #tpu.memory_space<vmem>>, vector<1x128xf32>
      %21 = vector.broadcast %20 : vector<1x128xf32> to vector<8x128xf32>
      %22 = arith.addf %19, %21 : vector<8x128xf32>
      %c0_21 = arith.constant 0 : index
      %c0_22 = arith.constant 0 : index
      %23 = vector.load %arg8[%c0_21, %c0_22] : memref<8x128xf32, #tpu.memory_space<vmem>>, vector<8x128xf32>
      tpu.vector_store %arg8[%c0_21, %c0_22], %22 {strides = array<i32>} : memref<8x128xf32, #tpu.memory_space<vmem>>, vector<8x128xf32>,
    } else {
    }
    return
  }
  func.func @transform_0(%arg0: i32, %arg1: i32, %arg2: i32) -> (i32, i32) {
    %c0_i32 = arith.constant 0 : i32
    return %arg0, %arg2 : i32, i32
  }
  func.func @transform_1(%arg0: i32, %arg1: i32, %arg2: i32) -> (i32, i32) {
    %c0_i32 = arith.constant 0 : i32
    return %arg2, %arg1 : i32, i32
  }
  func.func @transform_2(%arg0: i32, %arg1: i32, %arg2: i32) -> (i32, i32) {
    %c0_i32 = arith.constant 0 : i32
    %c0_i32_0 = arith.constant 0 : i32
    return %c0_i32, %arg1 : i32, i32
  }
  func.func @transform_3(%arg0: i32, %arg1: i32, %arg2: i32) -> (i32, i32) {
    %c0_i32 = arith.constant 0 : i32
    %c0_i32_0 = arith.constant 0 : i32
    return %arg2, %c0_i32 : i32, i32
  }
  func.func @transform_4(%arg0: i32, %arg1: i32, %arg2: i32) -> (i32, i32) {
    %c0_i32 = arith.constant 0 : i32
    %c0_i32_0 = arith.constant 0 : i32
    return %c0_i32, %arg1 : i32, i32
  }
  func.func @transform_5(%arg0: i32, %arg1: i32, %arg2: i32) -> (i32, i32) {
    %c0_i32 = arith.constant 0 : i32
    return %arg0, %arg1 : i32, i32
  }
}

</mosaic_0001>

<llo_original>
// kernel: tpu_custom_call.1
$region0: #{tpu_custom_call.1}
  #allocation0 [shape = 'u32[]', space=smem, size = 0x4, offset = 0x4, fixed_abs, tag = 'smem constant byte address 0x4 - core index']
  #allocation1 [shape = 'u32[144,128]{1,0:T(1,128)}', space=vmem, size = 0x12000, scoped, tag = 'internal scratch']
  #allocation2 [shape = 'f32[8,128]{1,0:T(8,128)}', space=vmem, size = 0x1000, scoped, tag = 'scratch operand']
  #allocation3 [shape = 'f32[8,8]{1,0:T(8,128)}', space=vmem, size = 0x1000, scoped, tag = 'scratch operand']
  %s0 = inlined_call_operand.vmem [shape: f32[8,128], index: 0, kind: input, shape index: {}]
  %s1 = inlined_call_operand.vmem [shape: f32[128,128], index: 1, kind: input, shape index: {}]
  %s2 = inlined_call_operand.vmem [shape: f32[1,128], index: 2, kind: input, shape index: {}]
  %s3 = inlined_call_operand.vmem [shape: f32[128,8], index: 3, kind: input, shape index: {}]
  %s4 = inlined_call_operand.hbm [shape: f32[8,128], index: 4, kind: input, shape index: {}]
  %s5 = inlined_call_operand.hbm [shape: f32[8,128], index: 5, kind: output, shape index: {}]
  %s6 = sld [smem:[#allocation0]]
  $region50: #{tpu_custom_call.1} parent=0
    _
  %s8 = ssub.s32 1, %s6
  %s9 = scalar_select 0, %s8, %s6
  $region1: #{tpu_custom_call.1} parent=0
    #allocation4 [shape = 'u8[4096]{0}', space=vmem, size = 0x1000, scoped, tag = 'input window, operand 4, single buffered']
    #allocation5 [shape = 's32[1]{0}', space=sflag, size = 0x4, scoped, tag = 'scoped memory for tpu_custom_call.1']
    #allocation6 [shape = 's32[1]{0}', space=sflag, size = 0x4, scoped, tag = 'scoped memory for tpu_custom_call.1']
    #allocation7 [shape = 'u8[4096]{0}', space=vmem, size = 0x1000, scoped, tag = 'output window, operand 0, single buffered']
    %10 = vsyncpa [#allocation5], 0
    %11 = vsyncpa [#allocation6], 0
    // Predicated region
    $region2: #{tpu_custom_call.1} parent=1 // pred_check
      _
    $region3: #{tpu_custom_call.1} parent=1 // pred_check_branch
      %13 = sbr.rel (0) target = $region5
    $region4: #{tpu_custom_call.1} parent=1 // pred_region
      _
    $region5: #{tpu_custom_call.1} parent=1 // pred_fallthru
      _
    // Predicated region
    $region6: #{tpu_custom_call.1} parent=1 // pred_check
      _
    $region7: #{tpu_custom_call.1} parent=1 // pred_check_branch
      %15 = sbr.rel (0) target = $region9
    $region8: #{tpu_custom_call.1} parent=1 // pred_region
      _
    $region9: #{tpu_custom_call.1} parent=1 // pred_fallthru
      _
    // Predicated region
    $region10: #{tpu_custom_call.1} parent=1 // pred_check
      _
    $region11: #{tpu_custom_call.1} parent=1 // pred_check_branch
      %17 = sbr.rel (0) target = $region13
    $region12: #{tpu_custom_call.1} parent=1 // pred_region
      _
    $region13: #{tpu_custom_call.1} parent=1 // pred_fallthru
      _
    // Predicated region
    $region14: #{tpu_custom_call.1} parent=1 // pred_check
      _
    $region15: #{tpu_custom_call.1} parent=1 // pred_check_branch
      %19 = sbr.rel (0) target = $region17
    $region16: #{tpu_custom_call.1} parent=1 // pred_region
      _
    $region17: #{tpu_custom_call.1} parent=1 // pred_fallthru
      _
    // Predicated region
    $region18: #{tpu_custom_call.1} parent=1 // pred_check
      _
    $region19: #{tpu_custom_call.1} parent=1 // pred_check_branch
      %21 = sbr.rel (0) target = $region21
    $region20: #{tpu_custom_call.1} parent=1 // pred_region
      %s23 = ssub.s32 128, 128
      %24 = vsyncadd [#allocation5], %s23
      %s26 = sshll.u32 [#allocation4], 4
      %s27 = int_to_ptr.vmem [resolvable:$true] %s26
      %29 = dma.hbm_to_vmem [thread:$0]  %s4, 128, %s27, [#allocation5]
    $region21: #{tpu_custom_call.1} parent=1 // pred_fallthru
      _
    // Predicated region
    $region22: #{tpu_custom_call.1} parent=1 // pred_check
      _
    $region23: #{tpu_custom_call.1} parent=1 // pred_check_branch
      %31 = sbr.rel (0) target = $region25
    $region24: #{tpu_custom_call.1} parent=1 // pred_region
      %32 = dma.done [#allocation5], 128
    $region25: #{tpu_custom_call.1} parent=1 // pred_fallthru
      _
    %p33 = scmp.eq.s32.totalorder 0, 0
    // Predicated region
    $region26: #{tpu_custom_call.1} parent=1 // pred_check
      %p34 = pneg %p33
    $region27: #{tpu_custom_call.1} parent=1 // pred_check_branch
      %36 = sbr.rel (%p34) target = $region29
    $region28: #{tpu_custom_call.1} parent=1 // pred_region
      %37 = vst [vmem:[#allocation2] sm:$0xff] 0.0
    $region29: #{tpu_custom_call.1} parent=1 // pred_fallthru
      _
    %p38 = scmp.eq.s32.totalorder 0, 0
    // Predicated region
    $region30: #{tpu_custom_call.1} parent=1 // pred_check
      %p39 = pneg %p38
    $region31: #{tpu_custom_call.1} parent=1 // pred_check_branch
      %41 = sbr.rel (%p39) target = $region33
    $region32: #{tpu_custom_call.1} parent=1 // pred_region
      // Predicated region
      $region34: #{tpu_custom_call.1} parent=32 // pred_check
        %p42 = pneg %p33
      $region35: #{tpu_custom_call.1} parent=32 // pred_check_branch
        %44 = sbr.rel (%p42) target = $region37
      $region36: #{tpu_custom_call.1} parent=32 // pred_region
        %vm45 = vcmask 64512
        %46 = vst.msk [vmem:[#allocation3] sm:$0xff] %vm45, 0.0
      $region37: #{tpu_custom_call.1} parent=32 // pred_fallthru
        _
      %v47 = vld [vmem:[#allocation3] sm:$0xff]
      %v48 = vld [vmem:[%s0] sm:$0xff]
      %v49 = vld [vmem:[%s3] sm:$0xff]
      %v50 = vld [vmem:[%s3 + $0x8] sm:$0xff]
      %v51 = vld [vmem:[%s3 + $0x10] sm:$0xff]
      %v52 = vld [vmem:[%s3 + $0x18] sm:$0xff]
      %v53 = vld [vmem:[%s3 + $0x20] sm:$0xff]
      %v54 = vld [vmem:[%s3 + $0x28] sm:$0xff]
      %v55 = vld [vmem:[%s3 + $0x30] sm:$0xff]
      %v56 = vld [vmem:[%s3 + $0x38] sm:$0xff]
      %v57 = vld [vmem:[%s3 + $0x40] sm:$0xff]
      %v58 = vld [vmem:[%s3 + $0x48] sm:$0xff]
      %v59 = vld [vmem:[%s3 + $0x50] sm:$0xff]
      %v60 = vld [vmem:[%s3 + $0x58] sm:$0xff]
      %v61 = vld [vmem:[%s3 + $0x60] sm:$0xff]
      %v62 = vld [vmem:[%s3 + $0x68] sm:$0xff]
      %v63 = vld [vmem:[%s3 + $0x70] sm:$0xff]
      %v64 = vld [vmem:[%s3 + $0x78] sm:$0xff]
      %65 = vmatprep.subr.mxu0 0.0
      %66 = vmatpush1.msra.mxu0 %v64
      %67 = vmatprep.subr.mxu0 0.0
      %68 = vmatpush1.msra.mxu0 %v63
      %69 = vmatprep.subr.mxu0 0.0
      %70 = vmatpush1.msra.mxu0 %v62
      %71 = vmatprep.subr.mxu0 0.0
      %72 = vmatpush1.msra.mxu0 %v61
      %73 = vmatprep.subr.mxu0 0.0
      %74 = vmatpush1.msra.mxu0 %v60
      %75 = vmatprep.subr.mxu0 0.0
      %76 = vmatpush1.msra.mxu0 %v59
      %77 = vmatprep.subr.mxu0 0.0
      %78 = vmatpush1.msra.mxu0 %v58
      %79 = vmatprep.subr.mxu0 0.0
      %80 = vmatpush1.msra.mxu0 %v57
      %81 = vmatprep.subr.mxu0 0.0
      %82 = vmatpush1.msra.mxu0 %v56
      %83 = vmatprep.subr.mxu0 0.0
      %84 = vmatpush1.msra.mxu0 %v55
      %85 = vmatprep.subr.mxu0 0.0
      %86 = vmatpush1.msra.mxu0 %v54
      %87 = vmatprep.subr.mxu0 0.0
      %88 = vmatpush1.msra.mxu0 %v53
      %89 = vmatprep.subr.mxu0 0.0
      %90 = vmatpush1.msra.mxu0 %v52
      %91 = vmatprep.subr.mxu0 0.0
      %92 = vmatpush1.msra.mxu0 %v51
      %93 = vmatprep.subr.mxu0 0.0
      %94 = vmatpush1.msra.mxu0 %v50
      %95 = vmatprep.subr.mxu0 0.0
      %96 = vmatpush1.msra.mxu0 %v49
      %97 = vmatprep.subr.mxu0 0.0
      %98 = vmatpush2.msra.mxu0 0.0
      %99 = vmatprep.subr.mxu0 0.0
      %100 = vmatpush2.msra.mxu0 0.0
      %101 = vmatprep.subr.mxu0 0.0
      %102 = vmatpush2.msra.mxu0 0.0
      %103 = vmatprep.subr.mxu0 0.0
      %104 = vmatpush2.msra.mxu0 0.0
      %105 = vmatprep.subr.mxu0 0.0
      %106 = vmatpush2.msra.mxu0 0.0
      %107 = vmatprep.subr.mxu0 0.0
      %108 = vmatpush2.msra.mxu0 0.0
      %109 = vmatprep.subr.mxu0 0.0
      %110 = vmatpush2.msra.mxu0 0.0
      %111 = vmatprep.subr.mxu0 0.0
      %112 = vmatpush2.msra.mxu0 0.0
      %113 = vmatprep.subr.mxu0 0.0
      %114 = vmatpush2.msra.mxu0 0.0
      %115 = vmatprep.subr.mxu0 0.0
      %116 = vmatpush2.msra.mxu0 0.0
      %117 = vmatprep.subr.mxu0 0.0
      %118 = vmatpush2.msra.mxu0 0.0
      %119 = vmatprep.subr.mxu0 0.0
      %120 = vmatpush2.msra.mxu0 0.0
      %121 = vmatprep.subr.mxu0 0.0
      %122 = vmatpush2.msra.mxu0 0.0
      %123 = vmatprep.subr.mxu0 0.0
      %124 = vmatpush2.msra.mxu0 0.0
      %125 = vmatprep.subr.mxu0 0.0
      %126 = vmatpush2.msra.mxu0 0.0
      %127 = vmatprep.subr.mxu0 0.0
      %128 = vmatpush2.msra.mxu0 0.0
      %129 = vmatprep.mubr.f32.mxu0 0.0
      %130 = vmatmul.mubr.f32.gmra.mxu0 %v48
      %v131 = vpop.f32.mrf.mxu0
      %v132 = vadd.f32 0.0, %v131
      %v133 = vpop.f32.mrf.mxu0
      %134 = vdwg.mxu0
      %v135 = vadd.f32 %v47, %v132
      %vm136 = vcmask 64512
      %137 = vst.msk [vmem:[#allocation3] sm:$0xff] %vm136, %v135
    $region33: #{tpu_custom_call.1} parent=1 // pred_fallthru
      _
    %v138 = vld [vmem:[#allocation2] sm:$0xff]
    %v139 = vld [vmem:[%s0] sm:$0xff]
    %v140 = vld [vmem:[%s1] sm:$0xff]
    %v141 = vld [vmem:[%s1 + $0x8] sm:$0xff]
    %v142 = vld [vmem:[%s1 + $0x10] sm:$0xff]
    %v143 = vld [vmem:[%s1 + $0x18] sm:$0xff]
    %v144 = vld [vmem:[%s1 + $0x20] sm:$0xff]
    %v145 = vld [vmem:[%s1 + $0x28] sm:$0xff]
    %v146 = vld [vmem:[%s1 + $0x30] sm:$0xff]
    %v147 = vld [vmem:[%s1 + $0x38] sm:$0xff]
    %v148 = vld [vmem:[%s1 + $0x40] sm:$0xff]
    %v149 = vld [vmem:[%s1 + $0x48] sm:$0xff]
    %v150 = vld [vmem:[%s1 + $0x50] sm:$0xff]
    %v151 = vld [vmem:[%s1 + $0x58] sm:$0xff]
    %v152 = vld [vmem:[%s1 + $0x60] sm:$0xff]
    %v153 = vld [vmem:[%s1 + $0x68] sm:$0xff]
    %v154 = vld [vmem:[%s1 + $0x70] sm:$0xff]
    %v155 = vld [vmem:[%s1 + $0x78] sm:$0xff]
    %156 = vmatprep.subr.mxu0 0.0
    %157 = vmatpush1.msra.mxu0 %v155
    %158 = vmatprep.subr.mxu0 0.0
    %159 = vmatpush1.msra.mxu0 %v154
    %160 = vmatprep.subr.mxu0 0.0
    %161 = vmatpush1.msra.mxu0 %v153
    %162 = vmatprep.subr.mxu0 0.0
    %163 = vmatpush1.msra.mxu0 %v152
    %164 = vmatprep.subr.mxu0 0.0
    %165 = vmatpush1.msra.mxu0 %v151
    %166 = vmatprep.subr.mxu0 0.0
    %167 = vmatpush1.msra.mxu0 %v150
    %168 = vmatprep.subr.mxu0 0.0
    %169 = vmatpush1.msra.mxu0 %v149
    %170 = vmatprep.subr.mxu0 0.0
    %171 = vmatpush1.msra.mxu0 %v148
    %172 = vmatprep.subr.mxu0 0.0
    %173 = vmatpush1.msra.mxu0 %v147
    %174 = vmatprep.subr.mxu0 0.0
    %175 = vmatpush1.msra.mxu0 %v146
    %176 = vmatprep.subr.mxu0 0.0
    %177 = vmatpush1.msra.mxu0 %v145
    %178 = vmatprep.subr.mxu0 0.0
    %179 = vmatpush1.msra.mxu0 %v144
    %180 = vmatprep.subr.mxu0 0.0
    %181 = vmatpush1.msra.mxu0 %v143
    %182 = vmatprep.subr.mxu0 0.0
    %183 = vmatpush1.msra.mxu0 %v142
    %184 = vmatprep.subr.mxu0 0.0
    %185 = vmatpush1.msra.mxu0 %v141
    %186 = vmatprep.subr.mxu0 0.0
    %187 = vmatpush1.msra.mxu0 %v140
    %188 = vmatprep.subr.mxu0 0.0
    %189 = vmatpush2.msra.mxu0 0.0
    %190 = vmatprep.subr.mxu0 0.0
    %191 = vmatpush2.msra.mxu0 0.0
    %192 = vmatprep.subr.mxu0 0.0
    %193 = vmatpush2.msra.mxu0 0.0
    %194 = vmatprep.subr.mxu0 0.0
    %195 = vmatpush2.msra.mxu0 0.0
    %196 = vmatprep.subr.mxu0 0.0
    %197 = vmatpush2.msra.mxu0 0.0
    %198 = vmatprep.subr.mxu0 0.0
    %199 = vmatpush2.msra.mxu0 0.0
    %200 = vmatprep.subr.mxu0 0.0
    %201 = vmatpush2.msra.mxu0 0.0
    %202 = vmatprep.subr.mxu0 0.0
    %203 = vmatpush2.msra.mxu0 0.0
    %204 = vmatprep.subr.mxu0 0.0
    %205 = vmatpush2.msra.mxu0 0.0
    %206 = vmatprep.subr.mxu0 0.0
    %207 = vmatpush2.msra.mxu0 0.0
    %208 = vmatprep.subr.mxu0 0.0
    %209 = vmatpush2.msra.mxu0 0.0
    %210 = vmatprep.subr.mxu0 0.0
    %211 = vmatpush2.msra.mxu0 0.0
    %212 = vmatprep.subr.mxu0 0.0
    %213 = vmatpush2.msra.mxu0 0.0
    %214 = vmatprep.subr.mxu0 0.0
    %215 = vmatpush2.msra.mxu0 0.0
    %216 = vmatprep.subr.mxu0 0.0
    %217 = vmatpush2.msra.mxu0 0.0
    %218 = vmatprep.subr.mxu0 0.0
    %219 = vmatpush2.msra.mxu0 0.0
    %220 = vmatprep.mubr.f32.mxu0 0.0
    %221 = vmatmul.mubr.f32.gmra.mxu0 %v139
    %v222 = vpop.f32.mrf.mxu0
    %v223 = vadd.f32 0.0, %v222
    %v224 = vpop.f32.mrf.mxu0
    %225 = vdwg.mxu0
    %v226 = vadd.f32 %v138, %v223
    %227 = vst [vmem:[#allocation2] sm:$0xff] %v226
    // Predicated region
    $region38: #{tpu_custom_call.1} parent=1 // pred_check
      %p228 = pneg %p33
    $region39: #{tpu_custom_call.1} parent=1 // pred_check_branch
      %230 = sbr.rel (%p228) target = $region41
    $region40: #{tpu_custom_call.1} parent=1 // pred_region
      %v231 = vld [vmem:[#allocation3] sm:$0xff]
      %v232 = vld [vmem:[#allocation4] sm:$0xff]
      %vm233 = vcmask 64512
      %v235 = vsel %vm233, %v231, 0
      %237 = vmatprep.subr.mxu0 0.0
      %238 = vmatpush1.msra.mxu0 0.0
      %239 = vmatprep.subr.mxu0 0.0
      %240 = vmatpush1.msra.mxu0 0.0
      %241 = vmatprep.subr.mxu0 0.0
      %242 = vmatpush1.msra.mxu0 0.0
      %243 = vmatprep.subr.mxu0 0.0
      %244 = vmatpush1.msra.mxu0 0.0
      %245 = vmatprep.subr.mxu0 0.0
      %246 = vmatpush1.msra.mxu0 0.0
      %247 = vmatprep.subr.mxu0 0.0
      %248 = vmatpush1.msra.mxu0 0.0
      %249 = vmatprep.subr.mxu0 0.0
      %250 = vmatpush1.msra.mxu0 0.0
      %251 = vmatprep.subr.mxu0 0.0
      %252 = vmatpush1.msra.mxu0 0.0
      %253 = vmatprep.subr.mxu0 0.0
      %254 = vmatpush1.msra.mxu0 0.0
      %255 = vmatprep.subr.mxu0 0.0
      %256 = vmatpush1.msra.mxu0 0.0
      %257 = vmatprep.subr.mxu0 0.0
      %258 = vmatpush1.msra.mxu0 0.0
      %259 = vmatprep.subr.mxu0 0.0
      %260 = vmatpush1.msra.mxu0 0.0
      %261 = vmatprep.subr.mxu0 0.0
      %262 = vmatpush1.msra.mxu0 0.0
      %263 = vmatprep.subr.mxu0 0.0
      %264 = vmatpush1.msra.mxu0 0.0
      %265 = vmatprep.subr.mxu0 0.0
      %266 = vmatpush1.msra.mxu0 0.0
      %267 = vmatprep.subr.mxu0 0.0
      %268 = vmatpush1.msra.mxu0 %v232
      %269 = vmatprep.subr.mxu0 0.0
      %270 = vmatpush2.msra.mxu0 0.0
      %271 = vmatprep.subr.mxu0 0.0
      %272 = vmatpush2.msra.mxu0 0.0
      %273 = vmatprep.subr.mxu0 0.0
      %274 = vmatpush2.msra.mxu0 0.0
      %275 = vmatprep.subr.mxu0 0.0
      %276 = vmatpush2.msra.mxu0 0.0
      %277 = vmatprep.subr.mxu0 0.0
      %278 = vmatpush2.msra.mxu0 0.0
      %279 = vmatprep.subr.mxu0 0.0
      %280 = vmatpush2.msra.mxu0 0.0
      %281 = vmatprep.subr.mxu0 0.0
      %282 = vmatpush2.msra.mxu0 0.0
      %283 = vmatprep.subr.mxu0 0.0
      %284 = vmatpush2.msra.mxu0 0.0
      %285 = vmatprep.subr.mxu0 0.0
      %286 = vmatpush2.msra.mxu0 0.0
      %287 = vmatprep.subr.mxu0 0.0
      %288 = vmatpush2.msra.mxu0 0.0
      %289 = vmatprep.subr.mxu0 0.0
      %290 = vmatpush2.msra.mxu0 0.0
      %291 = vmatprep.subr.mxu0 0.0
      %292 = vmatpush2.msra.mxu0 0.0
      %293 = vmatprep.subr.mxu0 0.0
      %294 = vmatpush2.msra.mxu0 0.0
      %295 = vmatprep.subr.mxu0 0.0
      %296 = vmatpush2.msra.mxu0 0.0
      %297 = vmatprep.subr.mxu0 0.0
      %298 = vmatpush2.msra.mxu0 0.0
      %299 = vmatprep.subr.mxu0 0.0
      %300 = vmatpush2.msra.mxu0 0.0
      %301 = vmatprep.mubr.f32.mxu0 0.0
      %302 = vmatmul.mubr.f32.gmra.mxu0 %v235
      %v303 = vpop.f32.mrf.mxu0
      %v304 = vadd.f32 0.0, %v303
      %v305 = vpop.f32.mrf.mxu0
      %306 = vdwg.mxu0
      %v307 = vld [vmem:[#allocation2] sm:$0xff]
      %v308 = vadd.f32 %v307, %v304
      %v309 = vld [vmem:[%s2] sm:$0x1]
      %v311 = vlaneseq
      %v312 = vshrl.u32 %v311, 7
      %v313 = vsub.s32 0, %v312
      %v314 = vrot.slane %v309, %v313
      %v316 = vadd.f32 %v308, %v314
      %317 = vst [vmem:[#allocation7] sm:$0xff] %v316
    $region41: #{tpu_custom_call.1} parent=1 // pred_fallthru
      _
    // Predicated region
    $region42: #{tpu_custom_call.1} parent=1 // pred_check
      _
    $region43: #{tpu_custom_call.1} parent=1 // pred_check_branch
      %319 = sbr.rel (0) target = $region45
    $region44: #{tpu_custom_call.1} parent=1 // pred_region
      %s321 = ssub.s32 128, 128
      %322 = vsyncadd [#allocation6], %s321
      %s324 = sshll.u32 [#allocation7], 4
      %s325 = int_to_ptr.vmem [resolvable:$true] %s324
      %327 = dma.vmem_to_hbm [thread:$0]  %s325, 128, %s5, [#allocation6]
    $region45: #{tpu_custom_call.1} parent=1 // pred_fallthru
      _
    // Predicated region
    $region46: #{tpu_custom_call.1} parent=1 // pred_check
      _
    $region47: #{tpu_custom_call.1} parent=1 // pred_check_branch
      %329 = sbr.rel (0) target = $region49
    $region48: #{tpu_custom_call.1} parent=1 // pred_region
      %330 = dma.done [#allocation6], 128
    $region49: #{tpu_custom_call.1} parent=1 // pred_fallthru
      _
    %331 = vsyncpa [#allocation5], 1
    %332 = vsyncpa [#allocation6], 1

</llo_original>
